<compile_context>
chip_gen: v7x
topology: tpu7x:2x2x1
jax: 0.10.0
libtpu: 0.0.40
codegen_flags: <defaults>
</compile_context>

<pallas_src>
import functools

import jax
import jax.numpy as jnp
from jax.experimental import pallas as pl
from jax.experimental.pallas import tpu as pltpu


# ----------------------------------------------------------------------------
# VMEM limit per TPU generation (v7x: 64 MiB/TC -> cap at 48; v5e/v6e: 128 MiB)
# ----------------------------------------------------------------------------
def _vmem_limit_bytes():
    try:
        cap = pltpu.get_tpu_info().vmem_capacity_bytes
    except Exception:  # pragma: no cover - conservative fallback
        cap = 64 * 1024 * 1024
    if cap >= 100 * 1024 * 1024:
        return 96 * 1024 * 1024     # v5e / v6e (128 MiB physical)
    return 48 * 1024 * 1024         # v7x (64 MiB per TensorCore)


# ----------------------------------------------------------------------------
# Kernel A: BatchNorm batch statistics of h = w1^T x via Gram accumulation
#   Accumulates Gram = x x^T (C, C) and xsum = sum_tokens x (C, 1) across the
#   batch grid (reduction axis -> "arbitrary").  The contraction axis is the
#   H*W token axis (real MXU work); sum(h), sum(h^2) are derived host-side.
# ----------------------------------------------------------------------------
def _bn_stats_kernel(x_ref, gram_ref, xsum_ref):
    # x_ref: (1, C, H*W)   gram_ref: (C, C)   xsum_ref: (C, 1)
    @pl.when(pl.program_id(0) == 0)
    def _():
        gram_ref[...] = jnp.zeros_like(gram_ref)
        xsum_ref[...] = jnp.zeros_like(xsum_ref)

    xb = x_ref[0]                                          # (C, HW), spatial on lanes
    gram_ref[...] += jax.lax.dot_general(
        xb, xb, (((1,), (1,)), ((), ())), preferred_element_type=jnp.float32)
    xsum_ref[...] += jnp.sum(xb, axis=1, keepdims=True)


def bn_stats(x_flat):
    B, C, HW = x_flat.shape
    return pl.pallas_call(
        _bn_stats_kernel,
        out_shape=(jax.ShapeDtypeStruct((C, C), jnp.float32),
                   jax.ShapeDtypeStruct((C, 1), jnp.float32)),
        grid=(B,),
        in_specs=[pl.BlockSpec((1, C, HW), lambda b: (b, 0, 0))],
        out_specs=(pl.BlockSpec((C, C), lambda b: (0, 0)),
                   pl.BlockSpec((C, 1), lambda b: (0, 0))),
        compiler_params=pltpu.CompilerParams(
            dimension_semantics=("arbitrary",),            # grid-carried reduction
            vmem_limit_bytes=_vmem_limit_bytes()),
    )(x_flat)


# ----------------------------------------------------------------------------
# Kernel B: fused conv1 -> (folded) BN -> ReLU -> conv2 -> involution -> ReLU
#   Per (batch, row-tile) grid step, all lane-dense:
#     x_tile : (C, tH*W)                  center of the halo'd window
#     h      : (Cmid, tH*W)    = relu(w1t_eff @ x_tile + b1_eff)
#     taps   : (K*K*C, tH*W)   = w2t @ h + b2t          (ONE matmul, all taps)
#     out    : (C, tH*W)       = relu(sum_k taps[kC:(k+1)C] * shift_k(x))
#   The H-direction 'same' padding is pre-materialized as zeros in the window;
#   each spatial shift is a static lane-offset slice of the window, with a
#   small iota column mask handling the W wrap-around.
# ----------------------------------------------------------------------------
def _fused_involution_kernel(K, W, tH, x_ref, w1t_ref, b1_ref, w2t_ref, b2_ref, o_ref):
    # x_ref : (1, 1, C, span)   span = tH*W + 2*pad*W + 2*pad (halo'd, H-padded)
    # w1t_ref: (Cmid, C)        b1_ref: (Cmid, 1)     (BN folded into conv1)
    # w2t_ref: (K*K*C, Cmid)    b2_ref: (K*K*C, 1)    (row index = k*C + c)
    # o_ref : (1, C, tH*W)      lane-dense output tile
    pad = (K - 1) // 2
    C = o_ref.shape[1]
    THW = tH * W

    xs_all = x_ref[0, 0]                                   # (C, span)
    center = pad * W + pad
    x_tile = xs_all[:, center:center + THW]                # (C, THW)

    # conv1 (1x1, BN scale/shift pre-folded) + ReLU
    h = jnp.dot(w1t_ref[...], x_tile, preferred_element_type=jnp.float32) + b1_ref[...]
    h = jnp.maximum(h, 0.0)
    # TODO(synk): DSS round_func / quantizer 'nan' is identity; not modeled further.

    # conv2 (1x1): all K*K involution taps in a single matmul.
    taps = jnp.dot(w2t_ref[...], h, preferred_element_type=jnp.float32) + b2_ref[...]

    # Involution: H boundary handled by the HBM zero pad inside the window,
    # W wrap handled by an iota column mask; shifts are static lane slices.
    col = jax.lax.broadcasted_iota(jnp.int32, (1, THW), 1) % W
    acc = jnp.zeros((C, THW), jnp.float32)
    for k in range(K * K):
        dh = k // K - pad
        dw = k % K - pad
        off = center + dh * W + dw
        xs = xs_all[:, off:off + THW]                      # shifted x (static slice)
        if dw != 0:
            ok = jnp.logical_and(col + dw >= 0, col + dw < W)
            xs = jnp.where(ok, xs, 0.0)
        acc = acc + taps[k * C:(k + 1) * C, :] * xs

    o_ref[0] = jnp.maximum(acc, 0.0).astype(o_ref.dtype)   # nn.ReLU (+ identity round)


def fused_involution(x_win, w1t_eff, b1_eff, w2t, b2t, K, H, W, tH):
    B, R, C, span = x_win.shape
    c_mid = w1t_eff.shape[0]
    THW = tH * W
    HW = H * W

    flops = B * HW * (2 * C * c_mid + 2 * c_mid * K * K * C + 3 * K * K * C)
    bytes_accessed = 4 * (x_win.size + B * HW * C
                          + w1t_eff.size + b1_eff.size + w2t.size + b2t.size)

    return pl.pallas_call(
        functools.partial(_fused_involution_kernel, K, W, tH),
        out_shape=jax.ShapeDtypeStruct((B, C, HW), x_win.dtype),
        grid=(B, R),
        in_specs=[
            pl.BlockSpec((1, 1, C, span), lambda b, r: (b, r, 0, 0)),
            pl.BlockSpec((c_mid, C), lambda b, r: (0, 0)),
            pl.BlockSpec((c_mid, 1), lambda b, r: (0, 0)),
            pl.BlockSpec((K * K * C, c_mid), lambda b, r: (0, 0)),
            pl.BlockSpec((K * K * C, 1), lambda b, r: (0, 0)),
        ],
        out_specs=pl.BlockSpec((1, C, THW), lambda b, r: (b, 0, r)),
        compiler_params=pltpu.CompilerParams(
            dimension_semantics=("parallel", "parallel"),   # B x row tiles -> megacore
            vmem_limit_bytes=_vmem_limit_bytes()),
        cost_estimate=pl.CostEstimate(
            flops=int(flops), transcendentals=0, bytes_accessed=int(bytes_accessed)),
    )(x_win, w1t_eff, b1_eff, w2t, b2t)


# ----------------------------------------------------------------------------
# Wrapper (NCHW external API; layout plumbing + BN folding only)
# ----------------------------------------------------------------------------
def _pick_row_tile(H, W, max_lanes=8192):
    # Largest tH dividing H with tH*W a multiple of 128 and <= max_lanes lanes;
    # fall back to the whole image (full-dim block is always legal).
    for tH in range(H, 0, -1):
        if H % tH:
            continue
        lanes = tH * W
        if lanes % 128 == 0 and lanes <= max_lanes:
            return tH
    return H


def dss_involution_forward(x, w1, gamma, beta, w2, b2, K=3, eps=1e-5, row_tile=None):
    """x: (B, C, H, W) float32 NCHW, stride=1. Returns (B, C, H, W)."""
    B, C, H, W = x.shape
    c_mid = w1.shape[1]
    pad = (K - 1) // 2
    HW = H * W

    # NCHW is already (B, C, H*W)-contiguous: no transpose needed.
    x_flat = x.reshape(B, C, HW)

    # Pass 1: whole-batch BN statistics of h = w1^T x via the Gram trick.
    gram, xsum = bn_stats(x_flat)                          # (C, C), (C, 1)
    n_tok = B * HW
    w1t = w1.T                                             # (Cmid, C)
    sum_h = w1t @ xsum                                     # (Cmid, 1)
    sumsq_h = jnp.sum((w1t @ gram) * w1t, axis=1, keepdims=True)
    mean = sum_h / n_tok
    # TODO(synk): single-pass E[h^2]-E[h]^2 can cancel for very large B*H*W /
    # large activations; a mean-subtracted second pass would be more robust.
    var = sumsq_h / n_tok - mean * mean
    scale = gamma.reshape(-1, 1) * jax.lax.rsqrt(var + eps)
    shift = beta.reshape(-1, 1) - mean * scale
    w1t_eff = w1t * scale                                  # (Cmid, C)
    b1_eff = shift                                         # (Cmid, 1)

    # conv2 params as ONE tap-major weight: torch output channel c*K^2 + k
    # -> row k*C + c, so each tap is an aligned (C, .) sublane slab in-kernel.
    w2t = w2.T.reshape(C, K * K, c_mid).transpose(1, 0, 2).reshape(K * K * C, c_mid)
    b2t = b2.reshape(C, K * K).T.reshape(K * K * C, 1)

    # Row tiling with halo: pick tH, zero-pad H in the flat layout, and build
    # overlapping (C, tH*W + halo) windows (cheap XLA copy, ~2*pad/tH overhead).
    tH = row_tile if row_tile is not None else _pick_row_tile(H, W)
    if H % tH != 0 or (tH != H and (tH * W) % 128 != 0):
        tH = H
    R = H // tH
    THW = tH * W
    lead = pad * W + pad
    span = THW + 2 * lead
    xp = jnp.pad(x_flat, ((0, 0), (0, 0), (lead, lead)))   # (B, C, (H+2p)*W + 2p)
    x_win = jnp.stack([xp[:, :, r * THW:r * THW + span] for r in range(R)], axis=1)

    # Pass 2: fused conv1 -> BN -> ReLU -> conv2 -> involution -> ReLU.
    out_flat = fused_involution(x_win, w1t_eff, b1_eff, w2t, b2t, K, H, W, tH)
    return out_flat.reshape(B, C, H, W)


# ----------------------------------------------------------------------------
# Pure-JAX reference (PyTorch semantics, no Pallas) for verification
# ----------------------------------------------------------------------------
def reference(x, w1, gamma, beta, w2, b2, K=3):
    B, C, H, W = x.shape
    xt = jnp.transpose(x, (0, 2, 3, 1)).reshape(-1, C)
    h = xt @ w1
    mean = h.mean(0, keepdims=True)
    var = ((h - mean) ** 2).mean(0, keepdims=True)
    h = (h - mean) / jnp.sqrt(var + 1e-5) * gamma + beta
    h = jnp.maximum(h, 0.0)
    wf = h @ w2 + b2
    weight = wf.reshape(B, H, W, C, K * K).transpose(0, 3, 4, 1, 2)
    pad = (K - 1) // 2
    xp = jnp.pad(x, ((0, 0), (0, 0), (pad, pad), (pad, pad)))
    acc = jnp.zeros((B, C, H, W), jnp.float32)
    for k in range(K * K):
        dh, dw = k // K, k % K
        acc = acc + weight[:, :, k] * xp[:, :, dh:dh + H, dw:dw + W]
    return jnp.maximum(acc, 0.0)


if __name__ == "__main__":
    B, C, H, W = 2, 8, 16, 16      # channels divisible by reduction_ratio=4
    K = 3                          # kernel_size
    Cmid = C // 4                  # reduction_ratio = 4
    Cout2 = K * K * C              # groups = channels (group_channels = 1)

    key = jax.random.PRNGKey(0)
    k1, k2, k3, k4 = jax.random.split(key, 4)
    x = jax.random.normal(k1, (B, C, H, W), jnp.float32)
    # conv1.w: torch (Cmid, C, 1, 1) -> stored as (C, Cmid) for w1^T x
    w1 = jax.random.normal(k2, (C, Cmid), jnp.float32) * 0.1
    # conv2.w: torch (Cout2, Cmid, 1, 1) -> stored as (Cmid, Cout2), column = c*K^2 + k
    w2 = jax.random.normal(k3, (Cmid, Cout2), jnp.float32) * 0.1
    # conv2.b: torch (Cout2, 1, 1) -> stored as (1, Cout2)
    b2 = jax.random.normal(k4, (1, Cout2), jnp.float32) * 0.1
    # BatchNorm2d default affine init
    gamma = jnp.ones((1, Cmid), jnp.float32)
    beta = jnp.zeros((1, Cmid), jnp.float32)

    ref = reference(x, w1, gamma, beta, w2, b2, K=K)

    # Default row tile (whole image at this size).
    out = jax.block_until_ready(dss_involution_forward(x, w1, gamma, beta, w2, b2, K=K))
    assert out.shape == (B, C, H, W)
    assert jnp.allclose(out, ref, atol=1e-4, rtol=1e-4), "mismatch (default tile)"

    # Explicit 2-way row split exercises the halo'd row-tile grid path.
    out2 = jax.block_until_ready(
        dss_involution_forward(x, w1, gamma, beta, w2, b2, K=K, row_tile=8))
    assert jnp.allclose(out2, ref, atol=1e-4, rtol=1e-4), "mismatch (row_tile=8)"

    print("KERNEL_OK")
</pallas_src>

<mosaic_0001>
module attributes {stable_mosaic.version = 11 : i64} {
  func.func @_bn_stats_kernel(%arg0: i32, %arg1: memref<1x8x256xf32, #tpu.memory_space<vmem>>, %arg2: memref<8x8xf32, #tpu.memory_space<vmem>>, %arg3: memref<8x1xf32, #tpu.memory_space<vmem>>) attributes {dimension_semantics = [#tpu.dimension_semantics<arbitrary>], iteration_bounds = array<i64: 2>, scalar_prefetch = 0 : i64, scratch_operands = 0 : i64, tpu.core_type = #tpu.core_type<tc>, window_params = [{transform_indices = @transform_0, window_bounds = array<i64: 1, 8, 256>}, {pipeline_mode = #tpu.pipeline_mode<synchronous>, transform_indices = @transform_1, window_bounds = array<i64: 8, 8>}, {pipeline_mode = #tpu.pipeline_mode<synchronous>, transform_indices = @transform_2, window_bounds = array<i64: 8, 1>}]} {
    %c0_i32 = arith.constant 0 : i32
    %0 = arith.cmpi eq, %arg0, %c0_i32 : i32
    %1 = arith.extui %0 : i1 to i32
    %c0_i32_0 = arith.constant 0 : i32
    %2 = arith.cmpi ne, %1, %c0_i32_0 : i32
    scf.if %2 {
      %cst_12 = arith.constant 0.000000e+00 : f32
      %14 = vector.broadcast %cst_12 : f32 to vector<8x8xf32>
      %c0_13 = arith.constant 0 : index
      %c0_14 = arith.constant 0 : index
      %15 = vector.load %arg2[%c0_13, %c0_14] : memref<8x8xf32, #tpu.memory_space<vmem>>, vector<8x8xf32>
      tpu.vector_store %arg2[%c0_13, %c0_14], %14 {strides = array<i32>} : memref<8x8xf32, #tpu.memory_space<vmem>>, vector<8x8xf32>,
      %cst_15 = arith.constant 0.000000e+00 : f32
      %16 = vector.broadcast %cst_15 : f32 to vector<8x1xf32>
      %c0_16 = arith.constant 0 : index
      %c0_17 = arith.constant 0 : index
      %17 = vector.load %arg3[%c0_16, %c0_17] : memref<8x1xf32, #tpu.memory_space<vmem>>, vector<8x1xf32>
      tpu.vector_store %arg3[%c0_16, %c0_17], %16 {strides = array<i32>} : memref<8x1xf32, #tpu.memory_space<vmem>>, vector<8x1xf32>,
    } else {
    }
    %c0 = arith.constant 0 : index
    %c0_1 = arith.constant 0 : index
    %c0_2 = arith.constant 0 : index
    %3 = vector.load %arg1[%c0, %c0_1, %c0_2] : memref<1x8x256xf32, #tpu.memory_space<vmem>>, vector<1x8x256xf32>
    %4 = vector.shape_cast %3 : vector<1x8x256xf32> to vector<8x256xf32>
    %c0_3 = arith.constant 0 : index
    %c0_4 = arith.constant 0 : index
    %5 = vector.load %arg2[%c0_3, %c0_4] : memref<8x8xf32, #tpu.memory_space<vmem>>, vector<8x8xf32>
    %cst = arith.constant dense<0.000000e+00> : vector<8x8xf32>
    %6 = tpu.matmul %4, %4, %cst {dimension_numbers = #tpu.dot_dimension_numbers<[1], [1], [0], [0], [0, 0, 1, 0], [], []>} : vector<8x256xf32>, vector<8x256xf32>, vector<8x8xf32> -> vector<8x8xf32>
    %7 = arith.addf %5, %6 : vector<8x8xf32>
    %c0_5 = arith.constant 0 : index
    %c0_6 = arith.constant 0 : index
    %8 = vector.load %arg2[%c0_5, %c0_6] : memref<8x8xf32, #tpu.memory_space<vmem>>, vector<8x8xf32>
    tpu.vector_store %arg2[%c0_5, %c0_6], %7 {strides = array<i32>} : memref<8x8xf32, #tpu.memory_space<vmem>>, vector<8x8xf32>,
    %c0_7 = arith.constant 0 : index
    %c0_8 = arith.constant 0 : index
    %9 = vector.load %arg3[%c0_7, %c0_8] : memref<8x1xf32, #tpu.memory_space<vmem>>, vector<8x1xf32>
    %cst_9 = arith.constant dense<0.000000e+00> : vector<8xf32>
    %10 = vector.multi_reduction <add>, %4, %cst_9 [1] : vector<8x256xf32> to vector<8xf32>
    %11 = vector.shape_cast %10 : vector<8xf32> to vector<8x1xf32>
    %12 = arith.addf %9, %11 : vector<8x1xf32>
    %c0_10 = arith.constant 0 : index
    %c0_11 = arith.constant 0 : index
    %13 = vector.load %arg3[%c0_10, %c0_11] : memref<8x1xf32, #tpu.memory_space<vmem>>, vector<8x1xf32>
    tpu.vector_store %arg3[%c0_10, %c0_11], %12 {strides = array<i32>} : memref<8x1xf32, #tpu.memory_space<vmem>>, vector<8x1xf32>,
    return
  }
  func.func @transform_0(%arg0: i32) -> (i32, i32, i32) {
    %c0_i32 = arith.constant 0 : i32
    %c0_i32_0 = arith.constant 0 : i32
    %c0_i32_1 = arith.constant 0 : i32
    return %arg0, %c0_i32, %c0_i32_0 : i32, i32, i32
  }
  func.func @transform_1(%arg0: i32) -> (i32, i32) {
    %c0_i32 = arith.constant 0 : i32
    %c0_i32_0 = arith.constant 0 : i32
    %c0_i32_1 = arith.constant 0 : i32
    return %c0_i32, %c0_i32_0 : i32, i32
  }
  func.func @transform_2(%arg0: i32) -> (i32, i32) {
    %c0_i32 = arith.constant 0 : i32
    %c0_i32_0 = arith.constant 0 : i32
    %c0_i32_1 = arith.constant 0 : i32
    return %c0_i32, %c0_i32_0 : i32, i32
  }
}

</mosaic_0001>

<llo_original>
// kernel: tpu_custom_call.1
$region0: #{tpu_custom_call.1}
  #allocation0 [shape = 'u32[]', space=smem, size = 0x4, offset = 0x4, fixed_abs, tag = 'smem constant byte address 0x4 - core index']
  #allocation1 [shape = 'u32[144,128]{1,0:T(1,128)}', space=vmem, size = 0x12000, scoped, tag = 'internal scratch']
  %s0 = inlined_call_operand.hbm [shape: f32[2,8,256], index: 0, kind: input, shape index: {}]
  %s1 = inlined_call_operand.hbm [shape: f32[8,8], index: 1, kind: output, shape index: {0}]
  %s2 = inlined_call_operand.vmem [shape: f32[8,1], index: 2, kind: output, shape index: {1}]
  %3 = xla_tuple %s1, %s2
  %s4 = sld [smem:[#allocation0]]
  $region53: #{tpu_custom_call.1} parent=0
    _
  %s6 = ssub.s32 1, %s4
  %s7 = scalar_select 0, %s6, %s4
  $region1: #{tpu_custom_call.1} parent=0
    #allocation2 [shape = 'u8[16384]{0}', space=vmem, size = 0x4000, scoped, tag = 'input window, operand 0']
    #allocation3 [shape = 's32[2]{0}', space=sflag, size = 0x8, scoped, tag = 'scoped memory for tpu_custom_call.1']
    #allocation4 [shape = 's32[2]{0}', space=sflag, size = 0x8, scoped, tag = 'scoped memory for tpu_custom_call.1']
    #allocation5 [shape = 'u8[4096]{0}', space=vmem, size = 0x1000, scoped, tag = 'output window, operand 0, single buffered']
    %8 = vsyncpa [#allocation3], 0
    %s9 = scalar_lea.sflag [#allocation3], 1
    %10 = vsyncpa %s9, 0
    %11 = vsyncpa [#allocation4], 0
    loop: start=0, step=1, limit=4
    $region2: #{tpu_custom_call.1} parent=1 // loop_pre_header
      _
    $region3: #{tpu_custom_call.1} parent=1 // loop_header
      %s13 = sphi 0, %s17
      %p14 = scmp.ge.s32.totalorder %s13, 4
      %s23 = sphi 0, %s25
      %s26 = sphi 0, %s23
      %s27 = sphi 0, %s26
      %s43 = sphi 0, %s27
      %s47 = sphi 0, %s47
      %s49 = sphi 0, %s47
      %s50 = sphi 0, %s49
      %s64 = sphi 0, %s50
      %s68 = sphi 0, %s68
      %s70 = sphi 0, %s68
      %s71 = sphi 0, %s70
      %s85 = sphi 0, %s71
    $region4: #{tpu_custom_call.1} parent=1 // loop_header_branch
      %16 = sbr.rel (%p14) target = $region8
    $region5: #{tpu_custom_call.1} parent=1 // loop_body
      %s18 = ssub.s32 %s13, 1
      %s19 = ssub.s32 %s13, 2
      %s20 = sadd.s32 %s13, 1
      %s21 = ssub.s32 %s13, %s20
      %p22 = scmp.eq.s32.totalorder %s21, 0
      %s24 = sadd.s32 %s23, 1
      %s25 = scalar_select %p22, %s23, %s24
      %p28 = pneg %p22
      %p29 = scmp.eq.s32.totalorder %s13, 1
      %p30 = por %p28, %p29
      %p31 = scmp.ne.s32.totalorder %s23, %s26
      %p32 = scmp.eq.s32.totalorder %s13, 0
      %p33 = por %p31, %p32
      %p34 = scmp.ne.s32.totalorder %s23, %s26
      %p35 = scmp.eq.s32.totalorder %s18, 1
      %p36 = por %p34, %p35
      %p37 = scmp.ne.s32.totalorder %s26, %s27
      %p38 = scmp.eq.s32.totalorder %s18, 0
      %p39 = por %p37, %p38
      %p40 = scmp.ne.s32.totalorder %s26, %s27
      %p41 = scmp.eq.s32.totalorder %s19, 1
      %p42 = por %p40, %p41
      %p44 = scmp.ne.s32.totalorder %s27, %s43
      %p45 = scmp.eq.s32.totalorder %s19, 0
      %p46 = por %p44, %p45
      %s48 = sadd.s32 %s47, 1
      %p51 = scmp.eq.s32.totalorder %s13, 1
      %p52 = scmp.ne.s32.totalorder %s47, %s49
      %p53 = scmp.eq.s32.totalorder %s13, 0
      %p54 = por %p52, %p53
      %p55 = scmp.ne.s32.totalorder %s47, %s49
      %p56 = scmp.eq.s32.totalorder %s18, 1
      %p57 = por %p55, %p56
      %p58 = scmp.ne.s32.totalorder %s49, %s50
      %p59 = scmp.eq.s32.totalorder %s18, 0
      %p60 = por %p58, %p59
      %p61 = scmp.ne.s32.totalorder %s49, %s50
      %p62 = scmp.eq.s32.totalorder %s19, 1
      %p63 = por %p61, %p62
      %p65 = scmp.ne.s32.totalorder %s50, %s64
      %p66 = scmp.eq.s32.totalorder %s19, 0
      %p67 = por %p65, %p66
      %s69 = sadd.s32 %s68, 1
      %p72 = scmp.eq.s32.totalorder %s13, 1
      %p73 = scmp.ne.s32.totalorder %s68, %s70
      %p74 = scmp.eq.s32.totalorder %s13, 0
      %p75 = por %p73, %p74
      %p76 = scmp.ne.s32.totalorder %s68, %s70
      %p77 = scmp.eq.s32.totalorder %s18, 1
      %p78 = por %p76, %p77
      %p79 = scmp.ne.s32.totalorder %s70, %s71
      %p80 = scmp.eq.s32.totalorder %s18, 0
      %p81 = por %p79, %p80
      %p82 = scmp.ne.s32.totalorder %s70, %s71
      %p83 = scmp.eq.s32.totalorder %s19, 1
      %p84 = por %p82, %p83
      %p86 = scmp.ne.s32.totalorder %s71, %s85
      %p87 = scmp.eq.s32.totalorder %s19, 0
      %p88 = por %p86, %p87
      %p89 = scmp.le.s32.totalorder 1, %s13
      %p90 = scmp.lt.s32.totalorder %s13, 3
      %p91 = pnand %p89, %p90
      %p92 = pneg %p91
      // Predicated region
      $region9: #{tpu_custom_call.1} parent=5 // pred_check
        _
      $region10: #{tpu_custom_call.1} parent=5 // pred_check_branch
        %94 = sbr.rel (%p91) target = $region12
      $region11: #{tpu_custom_call.1} parent=5 // pred_region
        %s95 = ssub.s32 %s13, 1
      $region12: #{tpu_custom_call.1} parent=5 // pred_fallthru
        _
      %p96 = scmp.lt.s32.totalorder %s13, 2
      // Predicated region
      $region13: #{tpu_custom_call.1} parent=5 // pred_check
        %p97 = pneg %p96
      $region14: #{tpu_custom_call.1} parent=5 // pred_check_branch
        %99 = sbr.rel (%p97) target = $region16
      $region15: #{tpu_custom_call.1} parent=5 // pred_region
        // Predicated region
        $region17: #{tpu_custom_call.1} parent=15 // pred_check
          %p100 = pneg %p33
        $region18: #{tpu_custom_call.1} parent=15 // pred_check_branch
          %102 = sbr.rel (%p100) target = $region20
        $region19: #{tpu_custom_call.1} parent=15 // pred_region
          %s103 = sand.u32 %s23, 1
          %s104 = scalar_lea.sflag [#allocation3], %s103
          %s105 = sand.u32 %s23, 1
          %s106 = smul.addr %s105, 16
          %s107 = scalar_lea.vmem [#allocation2], %s106
          %s109 = ssub.s32 256, 256
          %110 = vsyncadd %s104, %s109
          %s111 = smul.addr %s13, 2
          %s112 = smul.addr %s111, 128
          %s113 = scalar_lea.hbm %s0, %s112
          %s115 = sshll.u32 %s107, 4
          %s116 = int_to_ptr.vmem [resolvable:$true] %s115
          %118 = dma.hbm_to_vmem [thread:$0]  %s113, 256, %s116, %s104
        $region20: #{tpu_custom_call.1} parent=15 // pred_fallthru
          _
      $region16: #{tpu_custom_call.1} parent=5 // pred_fallthru
        _
      %p119 = scmp.le.s32.totalorder 1, %s13
      %p120 = scmp.lt.s32.totalorder %s13, 3
      %p121 = pnand %p119, %p120
      %p122 = pneg %p121
      // Predicated region
      $region21: #{tpu_custom_call.1} parent=5 // pred_check
        _
      $region22: #{tpu_custom_call.1} parent=5 // pred_check_branch
        %124 = sbr.rel (%p121) target = $region24
      $region23: #{tpu_custom_call.1} parent=5 // pred_region
        %s125 = ssub.s32 %s13, 1
        %s126 = sand.u32 %s26, 1
        %s127 = scalar_lea.sflag [#allocation3], %s126
        %s128 = sand.u32 %s26, 1
        %s129 = smul.addr %s128, 16
        %s130 = scalar_lea.vmem [#allocation2], %s129
        // Predicated region
        $region25: #{tpu_custom_call.1} parent=23 // pred_check
          %p131 = pneg %p39
        $region26: #{tpu_custom_call.1} parent=23 // pred_check_branch
          %133 = sbr.rel (%p131) target = $region28
        $region27: #{tpu_custom_call.1} parent=23 // pred_region
          %134 = dma.done %s127, 256
        $region28: #{tpu_custom_call.1} parent=23 // pred_fallthru
          _
        %s135 = sand.u32 %s26, 1
        %s136 = scalar_lea.sflag [#allocation3], %s135
        %s137 = sand.u32 %s26, 1
        %s138 = smul.addr %s137, 16
        %s139 = scalar_lea.vmem [#allocation2], %s138
        %p140 = pneg %p39
        %p141 = pneg %p36
        %p142 = pneg %p60
        %p143 = pneg %p57
        %p144 = pneg %p81
        %p145 = pneg %p78
        %p146 = scmp.eq.s32.totalorder %s18, 0
        // Predicated region
        $region29: #{tpu_custom_call.1} parent=23 // pred_check
          %p147 = pneg %p146
        $region30: #{tpu_custom_call.1} parent=23 // pred_check_branch
          %149 = sbr.rel (%p147) target = $region32
        $region31: #{tpu_custom_call.1} parent=23 // pred_region
          %vm150 = vcmask 64512
          %151 = vst.msk [vmem:[#allocation5] sm:$0xff] %vm150, 0.0
          %vm152 = vcmask 7168
          %153 = vst.msk [vmem:[%s2] sm:$0xff] %vm152, 0.0
        $region32: #{tpu_custom_call.1} parent=23 // pred_fallthru
          _
        %v154 = vld [vmem:[%s130] sm:$0xff]
        %v155 = vld [vmem:[%s130 + $0x8] sm:$0xff]
        %v156 = vld [vmem:[#allocation5] sm:$0xff]
        %157 = vmatprep.subr.mxu0 %v155
        %158 = vmatpush1.xpose.msra.mxu0 %v154
        %159 = vmatprep.subr.mxu0 0.0
        %160 = vmatpush1.xpose.msra.mxu0 0.0
        %161 = vmatprep.subr.mxu0 0.0
        %162 = vmatpush1.xpose.msra.mxu0 0.0
        %163 = vmatprep.subr.mxu0 0.0
        %164 = vmatpush1.xpose.msra.mxu0 0.0
        %165 = vmatprep.subr.mxu0 0.0
        %166 = vmatpush1.xpose.msra.mxu0 0.0
        %167 = vmatprep.subr.mxu0 0.0
        %168 = vmatpush1.xpose.msra.mxu0 0.0
        %169 = vmatprep.subr.mxu0 0.0
        %170 = vmatpush1.xpose.msra.mxu0 0.0
        %171 = vmatprep.subr.mxu0 0.0
        %172 = vmatpush1.xpose.msra.mxu0 0.0
        %173 = vmatprep.subr.mxu0 0.0
        %174 = vmatpush1.xpose.msra.mxu0 0.0
        %175 = vmatprep.subr.mxu0 0.0
        %176 = vmatpush1.xpose.msra.mxu0 0.0
        %177 = vmatprep.subr.mxu0 0.0
        %178 = vmatpush1.xpose.msra.mxu0 0.0
        %179 = vmatprep.subr.mxu0 0.0
        %180 = vmatpush1.xpose.msra.mxu0 0.0
        %181 = vmatprep.subr.mxu0 0.0
        %182 = vmatpush1.xpose.msra.mxu0 0.0
        %183 = vmatprep.subr.mxu0 0.0
        %184 = vmatpush1.xpose.msra.mxu0 0.0
        %185 = vmatprep.subr.mxu0 0.0
        %186 = vmatpush1.xpose.msra.mxu0 0.0
        %187 = vmatprep.subr.mxu0 0.0
        %188 = vmatpush1.xpose.msra.mxu0 0.0
        %189 = vmatprep.subr.mxu0 0.0
        %190 = vmatpush1.xpose.msra.mxu0 0.0
        %191 = vmatprep.subr.mxu0 0.0
        %192 = vmatpush1.xpose.msra.mxu0 0.0
        %193 = vmatprep.subr.mxu0 0.0
        %194 = vmatpush1.xpose.msra.mxu0 0.0
        %195 = vmatprep.subr.mxu0 0.0
        %196 = vmatpush1.xpose.msra.mxu0 0.0
        %197 = vmatprep.subr.mxu0 0.0
        %198 = vmatpush1.xpose.msra.mxu0 0.0
        %199 = vmatprep.subr.mxu0 0.0
        %200 = vmatpush1.xpose.msra.mxu0 0.0
        %201 = vmatprep.subr.mxu0 0.0
        %202 = vmatpush1.xpose.msra.mxu0 0.0
        %203 = vmatprep.subr.mxu0 0.0
        %204 = vmatpush1.xpose.msra.mxu0 0.0
        %205 = vmatprep.subr.mxu0 0.0
        %206 = vmatpush1.xpose.msra.mxu0 0.0
        %207 = vmatprep.subr.mxu0 0.0
        %208 = vmatpush1.xpose.msra.mxu0 0.0
        %209 = vmatprep.subr.mxu0 0.0
        %210 = vmatpush1.xpose.msra.mxu0 0.0
        %211 = vmatprep.subr.mxu0 0.0
        %212 = vmatpush1.xpose.msra.mxu0 0.0
        %213 = vmatprep.subr.mxu0 0.0
        %214 = vmatpush1.xpose.msra.mxu0 0.0
        %215 = vmatprep.subr.mxu0 0.0
        %216 = vmatpush1.xpose.msra.mxu0 0.0
        %217 = vmatprep.subr.mxu0 0.0
        %218 = vmatpush1.xpose.msra.mxu0 0.0
        %219 = vmatprep.subr.mxu0 0.0
        %220 = vmatpush1.xpose.msra.mxu0 0.0
        %221 = vmatprep.mubr.f32.mxu0 %v155
        %222 = vmatmul.mubr.f32.gmra.mrb[0].mxu0 %v154
        %v223 = vpop.f32.mrb[0].mxu0
        %v224 = vadd.f32 0.0, %v223
        %v225 = vpop.f32.mrb[0].mxu0
        %226 = vdwg.mxu0
        %v227 = vadd.f32 %v156, %v224
        %vm228 = vcmask 64512
        %229 = vst.msk [vmem:[#allocation5] sm:$0xff] %vm228, %v227
        %v230 = vld [vmem:[%s2] sm:$0xff]
        %v231 = vadd.f32 %v154, %v155
        %232 = vadd.xlane.f32.xlu0 %v231
        %v233 = vpop.xlane.xlu0 %232
        %v234 = vadd.f32 %v230, %v233
        %vm235 = vcmask 7168
        %236 = vst.msk [vmem:[%s2] sm:$0xff] %vm235, %v234
        // Predicated region
        $region33: #{tpu_custom_call.1} parent=23 // pred_check
          %p237 = pneg %p57
        $region34: #{tpu_custom_call.1} parent=23 // pred_check_branch
          %239 = sbr.rel (%p237) target = $region36
        $region35: #{tpu_custom_call.1} parent=23 // pred_region
          %s241 = ssub.s32 128, 128
          %242 = vsyncadd [#allocation4], %s241
          %s244 = sshll.u32 [#allocation5], 4
          %s245 = int_to_ptr.vmem [resolvable:$true] %s244
          %247 = dma.vmem_to_hbm [thread:$0]  %s245, 128, %s1, [#allocation4]
        $region36: #{tpu_custom_call.1} parent=23 // pred_fallthru
          _
        // Predicated region
        $region37: #{tpu_custom_call.1} parent=23 // pred_check
          %p248 = pneg %p78
        $region38: #{tpu_custom_call.1} parent=23 // pred_check_branch
          %250 = sbr.rel (%p248) target = $region40
        $region39: #{tpu_custom_call.1} parent=23 // pred_region
          _
        $region40: #{tpu_custom_call.1} parent=23 // pred_fallthru
          _
        // Predicated region
        $region41: #{tpu_custom_call.1} parent=23 // pred_check
          %p251 = pneg %p57
        $region42: #{tpu_custom_call.1} parent=23 // pred_check_branch
          %253 = sbr.rel (%p251) target = $region44
        $region43: #{tpu_custom_call.1} parent=23 // pred_region
          %254 = dma.done [#allocation4], 128
        $region44: #{tpu_custom_call.1} parent=23 // pred_fallthru
          _
        // Predicated region
        $region45: #{tpu_custom_call.1} parent=23 // pred_check
          %p255 = pneg %p78
        $region46: #{tpu_custom_call.1} parent=23 // pred_check_branch
          %257 = sbr.rel (%p255) target = $region48
        $region47: #{tpu_custom_call.1} parent=23 // pred_region
          _
        $region48: #{tpu_custom_call.1} parent=23 // pred_fallthru
          _
      $region24: #{tpu_custom_call.1} parent=5 // pred_fallthru
        _
      %p258 = scmp.le.s32.totalorder 2, %s13
      // Predicated region
      $region49: #{tpu_custom_call.1} parent=5 // pred_check
        %p259 = pneg %p258
      $region50: #{tpu_custom_call.1} parent=5 // pred_check_branch
        %261 = sbr.rel (%p259) target = $region52
      $region51: #{tpu_custom_call.1} parent=5 // pred_region
        %s262 = ssub.s32 %s13, 2
      $region52: #{tpu_custom_call.1} parent=5 // pred_fallthru
        _
    $region6: #{tpu_custom_call.1} parent=1 // loop_footer
      %s17 = sadd.s32 1, %s13
    $region7: #{tpu_custom_call.1} parent=1 // loop_footer_branch
      %12 = sbr.rel target = $region3
    $region8: #{tpu_custom_call.1} parent=1 // loop_exit
      _
    %263 = vsyncpa [#allocation3], 1
    %s264 = scalar_lea.sflag [#allocation3], 1
    %265 = vsyncpa %s264, 1
    %266 = vsyncpa [#allocation4], 1
    %s267 = scalar_lea.sflag [#allocation4], 1
    %268 = vsyncpa %s267, 1

</llo_original>
